<compile_context>
chip_gen: v5e
topology: v5e:2x2
jax: 0.10.0
libtpu: 0.0.40
codegen_flags: <defaults>
</compile_context>

<pallas_src>
import jax
import jax.numpy as jnp
from jax import lax
from jax.experimental import pallas as pl
from jax.experimental.pallas import tpu as pltpu

SMALL = 1e-08  # torch adds this inside log(); the stable log-sigmoid identity below makes it unnecessary.


def _pick_tq(seq_len):
    """Query-dim tile: full sequence when small, else a 128-multiple (keeps the
    double-buffered (1, TQ, S) f32 output block well under v7x/v5e scoped VMEM)."""
    if seq_len <= 512:
        return seq_len
    for tq in (512, 256, 128):
        if seq_len % tq == 0:
            return tq
    return seq_len  # odd lengths: single tile (raise vmem_limit_bytes if ever needed)


def _sigmoid_and_entropy(x):
    """p = sigmoid(x), h = p*log(p) + (1-p)*log(1-p); numerically stable.

    e = exp(-|x|) never overflows; 1 exp + 1 log per element (instead of 1 exp + 2 logs)
    and an EUP approximate reciprocal instead of a VALU divide.  (The torch reference
    adds 1e-8 inside the logs; the difference is negligible.)
    """
    a = jnp.abs(x)
    e = jnp.exp(-a)
    r = pl.reciprocal(1.0 + e, approx=True)          # sigmoid(|x|) in [0.5, 1]
    p = jnp.where(x >= 0, r, 1.0 - r)
    h = -(jnp.log(1.0 + e) + (1.0 - r) * a)
    return p, h


# --------------------------------------------------------------------------- #
# Fused kernel: mask logits + sigmoid + sparse/graph losses + vmask softmax/infor
# --------------------------------------------------------------------------- #
def _mask_kernel(tx_ref, inner_ref, vmask_ref, mask_ref, ppos_ref, loss_ref):
    tx = tx_ref[0]        # (TQ, K)  bf16
    inner = inner_ref[0]  # (S,  K)  bf16   (= temp_x @ imask for this batch)

    # torch: matmul(temp_x, matmul(temp_x, imask).t())  -> (TQ, S) slice of (S, S)
    logits = lax.dot_general(
        tx, inner,
        dimension_numbers=(((1,), (1,)), ((), ())),
        preferred_element_type=jnp.float32)                           # (TQ, S) f32

    m, h = _sigmoid_and_entropy(logits)
    mask_ref[...] = m[None]                                           # sigmoid mask

    # lane-reduce first, then sublane-reduce (XLU slot; keeps VALU/EUP free)
    sp = jnp.sum(jnp.sum(m, axis=-1, keepdims=True), keepdims=True)   # (1, 1)
    gr = jnp.sum(jnp.sum(h, axis=-1, keepdims=True), keepdims=True)   # (1, 1)

    # 2-class softmax of vmask == sigmoid of the logit difference (sequence on lanes)
    v = vmask_ref[0]                                                  # (2, TQ) f32
    d = v[1:2, :] - v[0:1, :]                                         # (1, TQ)
    p1, h_inf = _sigmoid_and_entropy(d)
    il = jnp.sum(h_inf, keepdims=True)                                # (1, 1)

    ppos_ref[...] = p1.reshape(ppos_ref.shape)
    loss_ref[...] = jnp.concatenate([sp, gr, il], axis=-1).reshape(loss_ref.shape)


def extract_mask_losses_and_probs(temp_x, imask, vmask):
    """Returns (sigmoid_mask (B,S,S), probs_pos (B,S), sparse_loss, graph_loss, infor_loss)."""
    B, S, K = temp_x.shape
    tq = _pick_tq(S)
    num_q = S // tq

    # bf16 MXU inputs, f32 accumulation (logits feed a sigmoid; precision loss negligible)
    tx_bf = temp_x.astype(jnp.bfloat16)
    # First matmul hoisted out of the per-batch grid: one (B*S, K) @ (K, K) MXU pass.
    inner = jnp.einsum("bsk,kl->bsl", tx_bf, imask.astype(jnp.bfloat16),
                       preferred_element_type=jnp.float32).astype(jnp.bfloat16)
    # Sequence axis on lanes for the vmask part (lane-dense loads/stores).
    vmask_t = jnp.transpose(vmask.astype(jnp.float32), (0, 2, 1))     # (B, 2, S)

    mask, ppos, losses = pl.pallas_call(
        _mask_kernel,
        out_shape=(
            jax.ShapeDtypeStruct((B, S, S), jnp.float32),
            jax.ShapeDtypeStruct((B, num_q, 1, tq), jnp.float32),     # probs_pos tiles
            jax.ShapeDtypeStruct((B, num_q, 1, 3), jnp.float32),      # packed (sparse, graph, infor) partials
        ),
        grid_spec=pltpu.PrefetchScalarGridSpec(
            num_scalar_prefetch=0,
            grid=(B, num_q),
            in_specs=[
                pl.BlockSpec((1, tq, K), lambda b, q: (b, q, 0)),
                pl.BlockSpec((1, S, K), lambda b, q: (b, 0, 0)),
                pl.BlockSpec((1, 2, tq), lambda b, q: (b, 0, q)),
            ],
            out_specs=[
                pl.BlockSpec((1, tq, S), lambda b, q: (b, q, 0)),
                pl.BlockSpec((1, 1, 1, tq), lambda b, q: (b, q, 0, 0)),
                pl.BlockSpec((1, 1, 1, 3), lambda b, q: (b, q, 0, 0)),
            ],
        ),
        compiler_params=pltpu.CompilerParams(
            dimension_semantics=("parallel", "parallel")),
    )(tx_bf, inner, vmask_t)

    sparse_loss = jnp.sum(losses[..., 0])
    graph_loss = jnp.sum(losses[..., 1])
    infor_loss = jnp.sum(losses[..., 2])
    probs_pos = ppos.reshape(B, S)
    return mask, probs_pos, sparse_loss, graph_loss, infor_loss


# --------------------------------------------------------------------------- #
# Forward (non-finetune, non-symmetric path of BERT.forward)
# --------------------------------------------------------------------------- #
def bert_forward(input_ids, mapper, imask, vmask):
    B, S = input_ids.shape

    # glue: row gather  mapper[input_ids[b], :]  -> (B, S, subset)
    temp_x = jnp.take(mapper, input_ids, axis=0).astype(jnp.float32)

    mask_pos, probs_pos, sparse_loss, graph_loss, infor_loss = \
        extract_mask_losses_and_probs(temp_x, imask, vmask)

    seq = S  # extracted_mask[..., 1].size(1)
    return (
        None,  # TODO(synk): output[1] (bert logits) — external bertmodel not reproduced
        None,  # TODO(synk): output[0] (bert loss)   — external bertmodel not reproduced
        infor_loss / (2 * seq),
        graph_loss / (2 * seq ** 2),
        sparse_loss / (2 * seq ** 2),
        mask_pos,    # == extracted_mask[..., 1] (the cat((1-m, m)) in torch is dead code here)
        probs_pos,
    )


# --------------------------------------------------------------------------- #
if __name__ == "__main__":
    key = jax.random.PRNGKey(0)
    B, S, V, SUBSET = 2, 8, 32, 16

    k1, k2, k3, k4 = jax.random.split(key, 4)
    input_ids = jax.random.randint(k1, (B, S), 0, V, dtype=jnp.int32)
    # imask is zeros in __init__; small randoms keep the sigmoid / losses non-degenerate.
    mapper = jax.random.normal(k2, (V, SUBSET), dtype=jnp.float32)
    imask = 0.1 * jax.random.normal(k3, (SUBSET, SUBSET), dtype=jnp.float32)
    vmask = jax.random.normal(k4, (B, S, 2), dtype=jnp.float32)  # stand-in for IMASK output

    outs = bert_forward(input_ids, mapper, imask, vmask)
    jax.block_until_ready(outs)
    print("KERNEL_OK")
</pallas_src>

<mosaic_0001>
module attributes {stable_mosaic.version = 11 : i64} {
  func.func @_mask_kernel(%arg0: i32, %arg1: i32, %arg2: memref<1x8x16xbf16, #tpu.memory_space<vmem>>, %arg3: memref<1x8x16xbf16, #tpu.memory_space<vmem>>, %arg4: memref<1x2x8xf32, #tpu.memory_space<vmem>>, %arg5: memref<1x8x8xf32, #tpu.memory_space<vmem>>, %arg6: memref<1x1x1x8xf32, #tpu.memory_space<vmem>>, %arg7: memref<1x1x1x3xf32, #tpu.memory_space<vmem>>) attributes {dimension_semantics = [#tpu.dimension_semantics<parallel>, #tpu.dimension_semantics<parallel>], iteration_bounds = array<i64: 2, 1>, scalar_prefetch = 0 : i64, scratch_operands = 0 : i64, tpu.core_type = #tpu.core_type<tc>, window_params = [{transform_indices = @transform_0, window_bounds = array<i64: 1, 8, 16>}, {transform_indices = @transform_1, window_bounds = array<i64: 1, 8, 16>}, {transform_indices = @transform_2, window_bounds = array<i64: 1, 2, 8>}, {transform_indices = @transform_3, window_bounds = array<i64: 1, 8, 8>}, {transform_indices = @transform_4, window_bounds = array<i64: 1, 1, 1, 8>}, {transform_indices = @transform_5, window_bounds = array<i64: 1, 1, 1, 3>}]} {
    %c0 = arith.constant 0 : index
    %c0_0 = arith.constant 0 : index
    %c0_1 = arith.constant 0 : index
    %0 = vector.load %arg2[%c0, %c0_0, %c0_1] : memref<1x8x16xbf16, #tpu.memory_space<vmem>>, vector<1x8x16xbf16>
    %1 = vector.shape_cast %0 : vector<1x8x16xbf16> to vector<8x16xbf16>
    %c0_2 = arith.constant 0 : index
    %c0_3 = arith.constant 0 : index
    %c0_4 = arith.constant 0 : index
    %2 = vector.load %arg3[%c0_2, %c0_3, %c0_4] : memref<1x8x16xbf16, #tpu.memory_space<vmem>>, vector<1x8x16xbf16>
    %3 = vector.shape_cast %2 : vector<1x8x16xbf16> to vector<8x16xbf16>
    %cst = arith.constant dense<0.000000e+00> : vector<8x8xf32>
    %4 = tpu.matmul %1, %3, %cst {dimension_numbers = #tpu.dot_dimension_numbers<[1], [1], [0], [0], [0, 0, 1, 0], [], []>} : vector<8x16xbf16>, vector<8x16xbf16>, vector<8x8xf32> -> vector<8x8xf32>
    %5 = math.absf %4 : vector<8x8xf32>
    %cst_5 = arith.constant 0.000000e+00 : f32
    %6 = vector.broadcast %cst_5 : f32 to vector<8x8xf32>
    %7 = arith.subf %6, %5 : vector<8x8xf32>
    %8 = math.exp %7 : vector<8x8xf32>
    %cst_6 = arith.constant 1.000000e+00 : f32
    %9 = vector.broadcast %cst_6 : f32 to vector<8x8xf32>
    %10 = arith.addf %9, %8 : vector<8x8xf32>
    %11 = tpu.reciprocal %10 {approx = true} : vector<8x8xf32> -> vector<8x8xf32>
    %cst_7 = arith.constant 0.000000e+00 : f32
    %12 = vector.broadcast %cst_7 : f32 to vector<8x8xf32>
    %13 = arith.cmpf oge, %4, %12 : vector<8x8xf32>
    %cst_8 = arith.constant 1.000000e+00 : f32
    %14 = vector.broadcast %cst_8 : f32 to vector<8x8xf32>
    %15 = arith.subf %14, %11 : vector<8x8xf32>
    %16 = arith.select %13, %11, %15 : vector<8x8xi1>, vector<8x8xf32>
    %cst_9 = arith.constant 1.000000e+00 : f32
    %17 = vector.broadcast %cst_9 : f32 to vector<8x8xf32>
    %18 = arith.addf %17, %8 : vector<8x8xf32>
    %19 = math.log %18 : vector<8x8xf32>
    %cst_10 = arith.constant 1.000000e+00 : f32
    %20 = vector.broadcast %cst_10 : f32 to vector<8x8xf32>
    %21 = arith.subf %20, %11 : vector<8x8xf32>
    %22 = arith.mulf %21, %5 : vector<8x8xf32>
    %23 = arith.addf %19, %22 : vector<8x8xf32>
    %cst_11 = arith.constant 0.000000e+00 : f32
    %24 = vector.broadcast %cst_11 : f32 to vector<8x8xf32>
    %25 = arith.subf %24, %23 : vector<8x8xf32>
    %26 = vector.shape_cast %16 : vector<8x8xf32> to vector<1x8x8xf32>
    %c0_12 = arith.constant 0 : index
    %c0_13 = arith.constant 0 : index
    %c0_14 = arith.constant 0 : index
    %27 = vector.load %arg5[%c0_12, %c0_13, %c0_14] : memref<1x8x8xf32, #tpu.memory_space<vmem>>, vector<1x8x8xf32>
    tpu.vector_store %arg5[%c0_12, %c0_13, %c0_14], %26 {strides = array<i32>} : memref<1x8x8xf32, #tpu.memory_space<vmem>>, vector<1x8x8xf32>,
    %cst_15 = arith.constant dense<0.000000e+00> : vector<8xf32>
    %28 = vector.multi_reduction <add>, %16, %cst_15 [1] : vector<8x8xf32> to vector<8xf32>
    %29 = vector.shape_cast %28 : vector<8xf32> to vector<8x1xf32>
    %30 = vector.shape_cast %29 : vector<8x1xf32> to vector<1x8x1xf32>
    %cst_16 = arith.constant dense<0.000000e+00> : vector<1xf32>
    %31 = vector.multi_reduction <add>, %30, %cst_16 [1, 2] : vector<1x8x1xf32> to vector<1xf32>
    %32 = vector.shape_cast %31 : vector<1xf32> to vector<1x1x1xf32>
    %33 = vector.extract %32[0, 0, 0] : f32 from vector<1x1x1xf32>
    %34 = vector.broadcast %33 : f32 to vector<1x1xf32>
    %cst_17 = arith.constant dense<0.000000e+00> : vector<8xf32>
    %35 = vector.multi_reduction <add>, %25, %cst_17 [1] : vector<8x8xf32> to vector<8xf32>
    %36 = vector.shape_cast %35 : vector<8xf32> to vector<8x1xf32>
    %37 = vector.shape_cast %36 : vector<8x1xf32> to vector<1x8x1xf32>
    %cst_18 = arith.constant dense<0.000000e+00> : vector<1xf32>
    %38 = vector.multi_reduction <add>, %37, %cst_18 [1, 2] : vector<1x8x1xf32> to vector<1xf32>
    %39 = vector.shape_cast %38 : vector<1xf32> to vector<1x1x1xf32>
    %40 = vector.extract %39[0, 0, 0] : f32 from vector<1x1x1xf32>
    %41 = vector.broadcast %40 : f32 to vector<1x1xf32>
    %c0_19 = arith.constant 0 : index
    %c0_20 = arith.constant 0 : index
    %c0_21 = arith.constant 0 : index
    %42 = vector.load %arg4[%c0_19, %c0_20, %c0_21] : memref<1x2x8xf32, #tpu.memory_space<vmem>>, vector<1x2x8xf32>
    %43 = vector.shape_cast %42 : vector<1x2x8xf32> to vector<2x8xf32>
    %44 = vector.extract_strided_slice %43 {offsets = [1, 0], sizes = [1, 8], strides = [1, 1]} : vector<2x8xf32> to vector<1x8xf32>
    %45 = vector.extract_strided_slice %43 {offsets = [0, 0], sizes = [1, 8], strides = [1, 1]} : vector<2x8xf32> to vector<1x8xf32>
    %46 = arith.subf %44, %45 : vector<1x8xf32>
    %47 = math.absf %46 : vector<1x8xf32>
    %cst_22 = arith.constant 0.000000e+00 : f32
    %48 = vector.broadcast %cst_22 : f32 to vector<1x8xf32>
    %49 = arith.subf %48, %47 : vector<1x8xf32>
    %50 = math.exp %49 : vector<1x8xf32>
    %cst_23 = arith.constant 1.000000e+00 : f32
    %51 = vector.broadcast %cst_23 : f32 to vector<1x8xf32>
    %52 = arith.addf %51, %50 : vector<1x8xf32>
    %53 = tpu.reciprocal %52 {approx = true} : vector<1x8xf32> -> vector<1x8xf32>
    %cst_24 = arith.constant 0.000000e+00 : f32
    %54 = vector.broadcast %cst_24 : f32 to vector<1x8xf32>
    %55 = arith.cmpf oge, %46, %54 : vector<1x8xf32>
    %cst_25 = arith.constant 1.000000e+00 : f32
    %56 = vector.broadcast %cst_25 : f32 to vector<1x8xf32>
    %57 = arith.subf %56, %53 : vector<1x8xf32>
    %58 = arith.select %55, %53, %57 : vector<1x8xi1>, vector<1x8xf32>
    %cst_26 = arith.constant 1.000000e+00 : f32
    %59 = vector.broadcast %cst_26 : f32 to vector<1x8xf32>
    %60 = arith.addf %59, %50 : vector<1x8xf32>
    %61 = math.log %60 : vector<1x8xf32>
    %cst_27 = arith.constant 1.000000e+00 : f32
    %62 = vector.broadcast %cst_27 : f32 to vector<1x8xf32>
    %63 = arith.subf %62, %53 : vector<1x8xf32>
    %64 = arith.mulf %63, %47 : vector<1x8xf32>
    %65 = arith.addf %61, %64 : vector<1x8xf32>
    %cst_28 = arith.constant 0.000000e+00 : f32
    %66 = vector.broadcast %cst_28 : f32 to vector<1x8xf32>
    %67 = arith.subf %66, %65 : vector<1x8xf32>
    %68 = vector.shape_cast %67 : vector<1x8xf32> to vector<1x1x8xf32>
    %cst_29 = arith.constant dense<0.000000e+00> : vector<1xf32>
    %69 = vector.multi_reduction <add>, %68, %cst_29 [1, 2] : vector<1x1x8xf32> to vector<1xf32>
    %70 = vector.shape_cast %69 : vector<1xf32> to vector<1x1x1xf32>
    %71 = vector.extract %70[0, 0, 0] : f32 from vector<1x1x1xf32>
    %72 = vector.broadcast %71 : f32 to vector<1x1xf32>
    %73 = vector.shape_cast %58 : vector<1x8xf32> to vector<1x1x1x8xf32>
    %c0_30 = arith.constant 0 : index
    %c0_31 = arith.constant 0 : index
    %c0_32 = arith.constant 0 : index
    %c0_33 = arith.constant 0 : index
    %74 = vector.load %arg6[%c0_30, %c0_31, %c0_32, %c0_33] : memref<1x1x1x8xf32, #tpu.memory_space<vmem>>, vector<1x1x1x8xf32>
    tpu.vector_store %arg6[%c0_30, %c0_31, %c0_32, %c0_33], %73 {strides = array<i32>} : memref<1x1x1x8xf32, #tpu.memory_space<vmem>>, vector<1x1x1x8xf32>,
    %75 = tpu.concatenate %34, %41, %72 in 1 : vector<1x1xf32>, vector<1x1xf32>, vector<1x1xf32> -> vector<1x3xf32>
    %76 = vector.shape_cast %75 : vector<1x3xf32> to vector<1x1x1x3xf32>
    %c0_34 = arith.constant 0 : index
    %c0_35 = arith.constant 0 : index
    %c0_36 = arith.constant 0 : index
    %c0_37 = arith.constant 0 : index
    %77 = vector.load %arg7[%c0_34, %c0_35, %c0_36, %c0_37] : memref<1x1x1x3xf32, #tpu.memory_space<vmem>>, vector<1x1x1x3xf32>
    tpu.vector_store %arg7[%c0_34, %c0_35, %c0_36, %c0_37], %76 {strides = array<i32>} : memref<1x1x1x3xf32, #tpu.memory_space<vmem>>, vector<1x1x1x3xf32>,
    return
  }
  func.func @transform_0(%arg0: i32, %arg1: i32) -> (i32, i32, i32) {
    %c0_i32 = arith.constant 0 : i32
    %c0_i32_0 = arith.constant 0 : i32
    return %arg0, %arg1, %c0_i32 : i32, i32, i32
  }
  func.func @transform_1(%arg0: i32, %arg1: i32) -> (i32, i32, i32) {
    %c0_i32 = arith.constant 0 : i32
    %c0_i32_0 = arith.constant 0 : i32
    %c0_i32_1 = arith.constant 0 : i32
    return %arg0, %c0_i32, %c0_i32_0 : i32, i32, i32
  }
  func.func @transform_2(%arg0: i32, %arg1: i32) -> (i32, i32, i32) {
    %c0_i32 = arith.constant 0 : i32
    %c0_i32_0 = arith.constant 0 : i32
    return %arg0, %c0_i32, %arg1 : i32, i32, i32
  }
  func.func @transform_3(%arg0: i32, %arg1: i32) -> (i32, i32, i32) {
    %c0_i32 = arith.constant 0 : i32
    %c0_i32_0 = arith.constant 0 : i32
    return %arg0, %arg1, %c0_i32 : i32, i32, i32
  }
  func.func @transform_4(%arg0: i32, %arg1: i32) -> (i32, i32, i32, i32) {
    %c0_i32 = arith.constant 0 : i32
    %c0_i32_0 = arith.constant 0 : i32
    %c0_i32_1 = arith.constant 0 : i32
    return %arg0, %arg1, %c0_i32, %c0_i32_0 : i32, i32, i32, i32
  }
  func.func @transform_5(%arg0: i32, %arg1: i32) -> (i32, i32, i32, i32) {
    %c0_i32 = arith.constant 0 : i32
    %c0_i32_0 = arith.constant 0 : i32
    %c0_i32_1 = arith.constant 0 : i32
    return %arg0, %arg1, %c0_i32, %c0_i32_0 : i32, i32, i32, i32
  }
}

</mosaic_0001>

<llo_original>
// kernel: tpu_custom_call.1
$region0: #{tpu_custom_call.1}
  #allocation0 [shape = 'u32[]', space=smem, size = 0x4, offset = 0x4, fixed_abs, tag = 'smem constant byte address 0x4 - core index']
  #allocation1 [shape = 'u32[72,128]{1,0:T(1,128)}', space=vmem, size = 0x9000, scoped, tag = 'internal scratch']
  %s0 = inlined_call_operand.hbm [shape: bf16[2,8,16], index: 0, kind: input, shape index: {}]
  %s1 = inlined_call_operand.hbm [shape: bf16[2,8,16], index: 1, kind: input, shape index: {}]
  %s2 = inlined_call_operand.hbm [shape: f32[2,2,8], index: 2, kind: input, shape index: {}]
  %s3 = inlined_call_operand.hbm [shape: f32[2,8,8], index: 3, kind: output, shape index: {0}]
  %s4 = inlined_call_operand.hbm [shape: f32[2,1,1,8], index: 4, kind: output, shape index: {1}]
  %s5 = inlined_call_operand.hbm [shape: f32[2,1,1,3], index: 5, kind: output, shape index: {2}]
  %6 = xla_tuple %s3, %s4, %s5
  %s7 = sld [smem:[#allocation0]]
  $region73: #{tpu_custom_call.1} parent=0
    _
  %s9 = ssub.s32 1, %s7
  %s10 = scalar_select 0, %s9, %s7
  $region1: #{tpu_custom_call.1} parent=0
    #allocation2 [shape = 'u8[4096]{0}', space=vmem, size = 0x1000, scoped, tag = 'input window, operand 0']
    #allocation3 [shape = 's32[2]{0}', space=sflag, size = 0x8, scoped, tag = 'scoped memory for tpu_custom_call.1']
    #allocation4 [shape = 's32[2]{0}', space=sflag, size = 0x8, scoped, tag = 'scoped memory for tpu_custom_call.1']
    #allocation5 [shape = 'u8[4096]{0}', space=vmem, size = 0x1000, scoped, tag = 'input window, operand 1']
    #allocation6 [shape = 's32[2]{0}', space=sflag, size = 0x8, scoped, tag = 'scoped memory for tpu_custom_call.1']
    #allocation7 [shape = 'u8[2048]{0}', space=vmem, size = 0x800, scoped, tag = 'input window, operand 2']
    #allocation8 [shape = 'u8[8192]{0}', space=vmem, size = 0x2000, scoped, tag = 'output window, operand 0']
    #allocation9 [shape = 'u8[1024]{0}', space=vmem, size = 0x400, scoped, tag = 'output window, operand 1']
    #allocation10 [shape = 's32[2]{0}', space=sflag, size = 0x8, scoped, tag = 'scoped memory for tpu_custom_call.1']
    #allocation11 [shape = 'u8[1024]{0}', space=vmem, size = 0x400, scoped, tag = 'output window, operand 2']
    %11 = vsyncpa [#allocation3], 0
    %s12 = scalar_lea.sflag [#allocation3], 1
    %13 = vsyncpa %s12, 0
    %14 = vsyncpa [#allocation6], 0
    %s15 = scalar_lea.sflag [#allocation6], 1
    %16 = vsyncpa %s15, 0
    %17 = vsyncpa [#allocation4], 0
    %s18 = scalar_lea.sflag [#allocation4], 1
    %19 = vsyncpa %s18, 0
    %20 = vsyncpa [#allocation10], 0
    %s21 = scalar_lea.sflag [#allocation10], 1
    %22 = vsyncpa %s21, 0
    loop: start=0, step=1, limit=4
    $region2: #{tpu_custom_call.1} parent=1 // loop_pre_header
      _
    $region3: #{tpu_custom_call.1} parent=1 // loop_header
      %s24 = sphi 0, %s28
      %p25 = scmp.ge.s32.totalorder %s24, 4
      %s31 = sphi 0, %s43
      %s32 = sphi 0, %s39
      %s33 = sphi 0, %s31
      %s34 = sphi 0, %s32
      %s35 = sphi 0, %s33
      %s36 = sphi 0, %s34
      %s48 = sphi 0, %s50
      %s51 = sphi 0, %s48
      %s52 = sphi 0, %s51
      %s68 = sphi 0, %s52
      %s74 = sphi 0, %s76
      %s77 = sphi 0, %s74
      %s78 = sphi 0, %s77
      %s94 = sphi 0, %s78
      %s102 = sphi 0, %s104
      %s105 = sphi 0, %s102
      %s106 = sphi 0, %s105
      %s122 = sphi 0, %s106
      %s130 = sphi 0, %s132
      %s133 = sphi 0, %s130
      %s134 = sphi 0, %s133
      %s150 = sphi 0, %s134
      %s158 = sphi 0, %s160
      %s161 = sphi 0, %s158
      %s162 = sphi 0, %s161
      %s178 = sphi 0, %s162
      %s186 = sphi 0, %s188
      %s189 = sphi 0, %s186
      %s190 = sphi 0, %s189
      %s206 = sphi 0, %s190
    $region4: #{tpu_custom_call.1} parent=1 // loop_header_branch
      %27 = sbr.rel (%p25) target = $region8
    $region5: #{tpu_custom_call.1} parent=1 // loop_body
      %s29 = ssub.s32 %s24, 1
      %s30 = ssub.s32 %s24, 2
      %s37 = sadd.s32 1, %s32
      %p38 = scmp.ge.s32.totalorder %s37, 1
      %s39 = scalar_select %p38, 0, %s37
      %s40 = sadd.s32 1, %s31
      %s41 = scalar_select %p38, %s40, %s31
      %p42 = scmp.ge.s32.totalorder %s41, 2
      %s43 = scalar_select %p42, 0, %s41
      %s44 = ssub.s32 %s31, %s43
      %s45 = ssub.s32 %s32, %s39
      %s46 = sor.u32 %s44, %s45
      %p47 = scmp.eq.s32.totalorder %s46, 0
      %s49 = sadd.s32 %s48, 1
      %s50 = scalar_select %p47, %s48, %s49
      %p53 = pneg %p47
      %p54 = scmp.eq.s32.totalorder %s24, 1
      %p55 = por %p53, %p54
      %p56 = scmp.ne.s32.totalorder %s48, %s51
      %p57 = scmp.eq.s32.totalorder %s24, 0
      %p58 = por %p56, %p57
      %p59 = scmp.ne.s32.totalorder %s48, %s51
      %p60 = scmp.eq.s32.totalorder %s29, 1
      %p61 = por %p59, %p60
      %p62 = scmp.ne.s32.totalorder %s51, %s52
      %p63 = scmp.eq.s32.totalorder %s29, 0
      %p64 = por %p62, %p63
      %p65 = scmp.ne.s32.totalorder %s51, %s52
      %p66 = scmp.eq.s32.totalorder %s30, 1
      %p67 = por %p65, %p66
      %p69 = scmp.ne.s32.totalorder %s52, %s68
      %p70 = scmp.eq.s32.totalorder %s30, 0
      %p71 = por %p69, %p70
      %s72 = ssub.s32 %s31, %s43
      %p73 = scmp.eq.s32.totalorder %s72, 0
      %s75 = sadd.s32 %s74, 1
      %s76 = scalar_select %p73, %s74, %s75
      %p79 = pneg %p73
      %p80 = scmp.eq.s32.totalorder %s24, 1
      %p81 = por %p79, %p80
      %p82 = scmp.ne.s32.totalorder %s74, %s77
      %p83 = scmp.eq.s32.totalorder %s24, 0
      %p84 = por %p82, %p83
      %p85 = scmp.ne.s32.totalorder %s74, %s77
      %p86 = scmp.eq.s32.totalorder %s29, 1
      %p87 = por %p85, %p86
      %p88 = scmp.ne.s32.totalorder %s77, %s78
      %p89 = scmp.eq.s32.totalorder %s29, 0
      %p90 = por %p88, %p89
      %p91 = scmp.ne.s32.totalorder %s77, %s78
      %p92 = scmp.eq.s32.totalorder %s30, 1
      %p93 = por %p91, %p92
      %p95 = scmp.ne.s32.totalorder %s78, %s94
      %p96 = scmp.eq.s32.totalorder %s30, 0
      %p97 = por %p95, %p96
      %s98 = ssub.s32 %s31, %s43
      %s99 = ssub.s32 %s32, %s39
      %s100 = sor.u32 %s98, %s99
      %p101 = scmp.eq.s32.totalorder %s100, 0
      %s103 = sadd.s32 %s102, 1
      %s104 = scalar_select %p101, %s102, %s103
      %p107 = pneg %p101
      %p108 = scmp.eq.s32.totalorder %s24, 1
      %p109 = por %p107, %p108
      %p110 = scmp.ne.s32.totalorder %s102, %s105
      %p111 = scmp.eq.s32.totalorder %s24, 0
      %p112 = por %p110, %p111
      %p113 = scmp.ne.s32.totalorder %s102, %s105
      %p114 = scmp.eq.s32.totalorder %s29, 1
      %p115 = por %p113, %p114
      %p116 = scmp.ne.s32.totalorder %s105, %s106
      %p117 = scmp.eq.s32.totalorder %s29, 0
      %p118 = por %p116, %p117
      %p119 = scmp.ne.s32.totalorder %s105, %s106
      %p120 = scmp.eq.s32.totalorder %s30, 1
      %p121 = por %p119, %p120
      %p123 = scmp.ne.s32.totalorder %s106, %s122
      %p124 = scmp.eq.s32.totalorder %s30, 0
      %p125 = por %p123, %p124
      %s126 = ssub.s32 %s31, %s43
      %s127 = ssub.s32 %s32, %s39
      %s128 = sor.u32 %s126, %s127
      %p129 = scmp.eq.s32.totalorder %s128, 0
      %s131 = sadd.s32 %s130, 1
      %s132 = scalar_select %p129, %s130, %s131
      %p135 = pneg %p129
      %p136 = scmp.eq.s32.totalorder %s24, 1
      %p137 = por %p135, %p136
      %p138 = scmp.ne.s32.totalorder %s130, %s133
      %p139 = scmp.eq.s32.totalorder %s24, 0
      %p140 = por %p138, %p139
      %p141 = scmp.ne.s32.totalorder %s130, %s133
      %p142 = scmp.eq.s32.totalorder %s29, 1
      %p143 = por %p141, %p142
      %p144 = scmp.ne.s32.totalorder %s133, %s134
      %p145 = scmp.eq.s32.totalorder %s29, 0
      %p146 = por %p144, %p145
      %p147 = scmp.ne.s32.totalorder %s133, %s134
      %p148 = scmp.eq.s32.totalorder %s30, 1
      %p149 = por %p147, %p148
      %p151 = scmp.ne.s32.totalorder %s134, %s150
      %p152 = scmp.eq.s32.totalorder %s30, 0
      %p153 = por %p151, %p152
      %s154 = ssub.s32 %s31, %s43
      %s155 = ssub.s32 %s32, %s39
      %s156 = sor.u32 %s154, %s155
      %p157 = scmp.eq.s32.totalorder %s156, 0
      %s159 = sadd.s32 %s158, 1
      %s160 = scalar_select %p157, %s158, %s159
      %p163 = pneg %p157
      %p164 = scmp.eq.s32.totalorder %s24, 1
      %p165 = por %p163, %p164
      %p166 = scmp.ne.s32.totalorder %s158, %s161
      %p167 = scmp.eq.s32.totalorder %s24, 0
      %p168 = por %p166, %p167
      %p169 = scmp.ne.s32.totalorder %s158, %s161
      %p170 = scmp.eq.s32.totalorder %s29, 1
      %p171 = por %p169, %p170
      %p172 = scmp.ne.s32.totalorder %s161, %s162
      %p173 = scmp.eq.s32.totalorder %s29, 0
      %p174 = por %p172, %p173
      %p175 = scmp.ne.s32.totalorder %s161, %s162
      %p176 = scmp.eq.s32.totalorder %s30, 1
      %p177 = por %p175, %p176
      %p179 = scmp.ne.s32.totalorder %s162, %s178
      %p180 = scmp.eq.s32.totalorder %s30, 0
      %p181 = por %p179, %p180
      %s182 = ssub.s32 %s31, %s43
      %s183 = ssub.s32 %s32, %s39
      %s184 = sor.u32 %s182, %s183
      %p185 = scmp.eq.s32.totalorder %s184, 0
      %s187 = sadd.s32 %s186, 1
      %s188 = scalar_select %p185, %s186, %s187
      %p191 = pneg %p185
      %p192 = scmp.eq.s32.totalorder %s24, 1
      %p193 = por %p191, %p192
      %p194 = scmp.ne.s32.totalorder %s186, %s189
      %p195 = scmp.eq.s32.totalorder %s24, 0
      %p196 = por %p194, %p195
      %p197 = scmp.ne.s32.totalorder %s186, %s189
      %p198 = scmp.eq.s32.totalorder %s29, 1
      %p199 = por %p197, %p198
      %p200 = scmp.ne.s32.totalorder %s189, %s190
      %p201 = scmp.eq.s32.totalorder %s29, 0
      %p202 = por %p200, %p201
      %p203 = scmp.ne.s32.totalorder %s189, %s190
      %p204 = scmp.eq.s32.totalorder %s30, 1
      %p205 = por %p203, %p204
      %p207 = scmp.ne.s32.totalorder %s190, %s206
      %p208 = scmp.eq.s32.totalorder %s30, 0
      %p209 = por %p207, %p208
      %p210 = scmp.le.s32.totalorder 1, %s24
      %p211 = scmp.lt.s32.totalorder %s24, 3
      %p212 = pnand %p210, %p211
      %p213 = pneg %p212
      // Predicated region
      $region9: #{tpu_custom_call.1} parent=5 // pred_check
        _
      $region10: #{tpu_custom_call.1} parent=5 // pred_check_branch
        %215 = sbr.rel (%p212) target = $region12
      $region11: #{tpu_custom_call.1} parent=5 // pred_region
        %s216 = ssub.s32 %s24, 1
      $region12: #{tpu_custom_call.1} parent=5 // pred_fallthru
        _
      %p217 = scmp.lt.s32.totalorder %s24, 2
      // Predicated region
      $region13: #{tpu_custom_call.1} parent=5 // pred_check
        %p218 = pneg %p217
      $region14: #{tpu_custom_call.1} parent=5 // pred_check_branch
        %220 = sbr.rel (%p218) target = $region16
      $region15: #{tpu_custom_call.1} parent=5 // pred_region
        // Predicated region
        $region17: #{tpu_custom_call.1} parent=15 // pred_check
          %p221 = pneg %p58
        $region18: #{tpu_custom_call.1} parent=15 // pred_check_branch
          %223 = sbr.rel (%p221) target = $region20
        $region19: #{tpu_custom_call.1} parent=15 // pred_region
          %s224 = sand.u32 %s48, 1
          %s225 = scalar_lea.sflag [#allocation3], %s224
          %s226 = sand.u32 %s48, 1
          %s227 = smul.addr %s226, 4
          %s228 = scalar_lea.vmem [#allocation2], %s227
          %230 = vsyncadd %s225, 0
          %s231 = sadd.s32 %s32, %s31
          %s232 = smul.addr %s231, 4
          %s233 = scalar_lea.hbm %s0, %s232
          %s235 = sshll.u32 %s233, 4
          %s236 = int_to_ptr.hbm [resolvable:$true] %s235
          %s237 = sshll.u32 %s228, 4
          %s238 = int_to_ptr.vmem [resolvable:$true] %s237
          %240 = dma.hbm_to_vmem [thread:$0]  %s236, 64, %s238, %s225
        $region20: #{tpu_custom_call.1} parent=15 // pred_fallthru
          _
        // Predicated region
        $region21: #{tpu_custom_call.1} parent=15 // pred_check
          %p241 = pneg %p84
        $region22: #{tpu_custom_call.1} parent=15 // pred_check_branch
          %243 = sbr.rel (%p241) target = $region24
        $region23: #{tpu_custom_call.1} parent=15 // pred_region
          %s244 = sand.u32 %s24, 1
          %s245 = scalar_lea.sflag [#allocation6], %s244
          %s246 = sand.u32 %s74, 1
          %s247 = smul.addr %s246, 4
          %s248 = scalar_lea.vmem [#allocation5], %s247
          %250 = vsyncadd %s245, 0
          %s251 = smul.addr %s31, 4
          %s252 = scalar_lea.hbm %s1, %s251
          %s254 = sshll.u32 %s252, 4
          %s255 = int_to_ptr.hbm [resolvable:$true] %s254
          %s256 = sshll.u32 %s248, 4
          %s257 = int_to_ptr.vmem [resolvable:$true] %s256
          %259 = dma.hbm_to_vmem [thread:$0]  %s255, 64, %s257, %s245
        $region24: #{tpu_custom_call.1} parent=15 // pred_fallthru
          _
        // Predicated region
        $region25: #{tpu_custom_call.1} parent=15 // pred_check
          %p260 = pneg %p112
        $region26: #{tpu_custom_call.1} parent=15 // pred_check_branch
          %262 = sbr.rel (%p260) target = $region28
        $region27: #{tpu_custom_call.1} parent=15 // pred_region
          %s263 = sand.u32 %s24, 1
          %s264 = scalar_lea.sflag [#allocation6], %s263
          %s265 = sand.u32 %s102, 1
          %s266 = smul.addr %s265, 2
          %s267 = scalar_lea.vmem [#allocation7], %s266
          %269 = vsyncadd %s264, 0
          %s270 = sadd.s32 %s32, %s31
          %s271 = smul.addr %s270, 2
          %s272 = scalar_lea.hbm %s2, %s271
          %s274 = sshll.u32 %s272, 4
          %s275 = int_to_ptr.hbm [resolvable:$true] %s274
          %s276 = sshll.u32 %s267, 4
          %s277 = int_to_ptr.vmem [resolvable:$true] %s276
          %279 = dma.hbm_to_vmem [thread:$0]  %s275, 32, %s277, %s264
        $region28: #{tpu_custom_call.1} parent=15 // pred_fallthru
          _
      $region16: #{tpu_custom_call.1} parent=5 // pred_fallthru
        _
      %p280 = scmp.le.s32.totalorder 1, %s24
      %p281 = scmp.lt.s32.totalorder %s24, 3
      %p282 = pnand %p280, %p281
      %p283 = pneg %p282
      // Predicated region
      $region29: #{tpu_custom_call.1} parent=5 // pred_check
        _
      $region30: #{tpu_custom_call.1} parent=5 // pred_check_branch
        %285 = sbr.rel (%p282) target = $region32
      $region31: #{tpu_custom_call.1} parent=5 // pred_region
        %s286 = ssub.s32 %s24, 1
        %s287 = sand.u32 %s51, 1
        %s288 = scalar_lea.sflag [#allocation3], %s287
        %s289 = sand.u32 %s51, 1
        %s290 = smul.addr %s289, 4
        %s291 = scalar_lea.vmem [#allocation2], %s290
        // Predicated region
        $region33: #{tpu_custom_call.1} parent=31 // pred_check
          %p292 = pneg %p64
        $region34: #{tpu_custom_call.1} parent=31 // pred_check_branch
          %294 = sbr.rel (%p292) target = $region36
        $region35: #{tpu_custom_call.1} parent=31 // pred_region
          %296 = dma.done %s288, 64
        $region36: #{tpu_custom_call.1} parent=31 // pred_fallthru
          _
        %s297 = sand.u32 %s29, 1
        %s298 = scalar_lea.sflag [#allocation6], %s297
        %s299 = sand.u32 %s77, 1
        %s300 = smul.addr %s299, 4
        %s301 = scalar_lea.vmem [#allocation5], %s300
        // Predicated region
        $region37: #{tpu_custom_call.1} parent=31 // pred_check
          %p302 = pneg %p90
        $region38: #{tpu_custom_call.1} parent=31 // pred_check_branch
          %304 = sbr.rel (%p302) target = $region40
        $region39: #{tpu_custom_call.1} parent=31 // pred_region
          %306 = dma.done %s298, 64
        $region40: #{tpu_custom_call.1} parent=31 // pred_fallthru
          _
        %s307 = sand.u32 %s29, 1
        %s308 = scalar_lea.sflag [#allocation6], %s307
        %s309 = sand.u32 %s105, 1
        %s310 = smul.addr %s309, 2
        %s311 = scalar_lea.vmem [#allocation7], %s310
        // Predicated region
        $region41: #{tpu_custom_call.1} parent=31 // pred_check
          %p312 = pneg %p118
        $region42: #{tpu_custom_call.1} parent=31 // pred_check_branch
          %314 = sbr.rel (%p312) target = $region44
        $region43: #{tpu_custom_call.1} parent=31 // pred_region
          %316 = dma.done %s308, 32
        $region44: #{tpu_custom_call.1} parent=31 // pred_fallthru
          _
        %s317 = sand.u32 %s51, 1
        %s318 = scalar_lea.sflag [#allocation3], %s317
        %s319 = sand.u32 %s51, 1
        %s320 = smul.addr %s319, 4
        %s321 = scalar_lea.vmem [#allocation2], %s320
        %p322 = pneg %p64
        %p323 = pneg %p61
        %s324 = sand.u32 %s29, 1
        %s325 = scalar_lea.sflag [#allocation6], %s324
        %s326 = sand.u32 %s77, 1
        %s327 = smul.addr %s326, 4
        %s328 = scalar_lea.vmem [#allocation5], %s327
        %p329 = pneg %p90
        %p330 = pneg %p87
        %s331 = sand.u32 %s29, 1
        %s332 = scalar_lea.sflag [#allocation6], %s331
        %s333 = sand.u32 %s105, 1
        %s334 = smul.addr %s333, 2
        %s335 = scalar_lea.vmem [#allocation7], %s334
        %p336 = pneg %p118
        %p337 = pneg %p115
        %p338 = pneg %p146
        %p339 = pneg %p143
        %s340 = sand.u32 %s133, 1
        %s341 = scalar_lea.sflag [#allocation4], %s340
        %s342 = sand.u32 %s133, 1
        %s343 = smul.addr %s342, 8
        %s344 = scalar_lea.vmem [#allocation8], %s343
        %p345 = pneg %p174
        %p346 = pneg %p171
        %s347 = sand.u32 %s29, 1
        %s348 = scalar_lea.sflag [#allocation10], %s347
        %s349 = sand.u32 %s161, 1
        %s350 = scalar_lea.vmem [#allocation9], %s349
        %p351 = pneg %p202
        %p352 = pneg %p199
        %s353 = sand.u32 %s29, 1
        %s354 = scalar_lea.sflag [#allocation10], %s353
        %s355 = sand.u32 %s189, 1
        %s356 = scalar_lea.vmem [#allocation11], %s355
        %v358 = vld [vmem:[%s291] sm:$0xf]
        %v359 = vld [vmem:[%s301] sm:$0xf]
        %vm360 = vcmask 130048
        %v362 = vsel %vm360, %v358, 0
        %v365 = vsel %vm360, %v359, 0
        %367 = vmatpush.bf16.xpose.msra.mxu0 0
        %368 = vmatpush.bf16.xpose.msra.mxu0 0
        %369 = vmatpush.bf16.xpose.msra.mxu0 0
        %370 = vmatpush.bf16.xpose.msra.mxu0 0
        %371 = vmatpush.bf16.xpose.msra.mxu0 0
        %372 = vmatpush.bf16.xpose.msra.mxu0 0
        %373 = vmatpush.bf16.xpose.msra.mxu0 0
        %374 = vmatpush.bf16.xpose.msra.mxu0 %v365
        %375 = vmatmul.bf16.gmra.mxu0 %v362
        %v376 = vpop.f32.mrf.mxu0
        %v377 = vadd.f32 0.0, %v376
        %v378 = vpop.f32.mrf.mxu0
        %379 = vdwg.mxu0
        %v380 = vand.u32 2147483647, %v377
        %v381 = vsub.f32 0.0, %v380
        %v382 = vmul.f32 %v381, 1.442695
        %v383 = vpow.pop %v382
        %v384 = vadd.f32 %v383, 1.0
        %v385 = vrcp.pop %v384
        %vm386 = vcmp.ge.f32.partialorder %v377, 0.0
        %v387 = vsub.f32 1.0, %v385
        %v388 = vsel %vm386, %v385, %v387
        %v389 = vlog2.pop %v384
        %v390 = vmul.f32 %v389, 0.6931472
        %v391 = vmul.f32 %v387, %v380
        %v392 = vadd.f32 %v390, %v391
        %v393 = vsub.f32 0.0, %v392
        %vm394 = vcmask 64512
        %395 = vst.msk [vmem:[%s344] sm:$0xff] %vm394, %v388
        %v396 = vsel %vm394, %v388, 0.0
        %397 = vadd.xlane.f32.xlu0 %v396
        %v398 = vpop.xlane.xlu0 %397
        %vm399 = vcmask 7168
        %v400 = vsel %vm399, %v398, 0.0
        %401 = vadd.xlane.f32.xlu0 %v400
        %v402 = vpop.xlane.xlu0 %401
        %v403 = vrot.slane %v402, 4
        %v404 = vadd.f32 %v402, %v403
        %v405 = vrot.slane %v404, 2
        %v406 = vadd.f32 %v404, %v405
        %v407 = vrot.slane %v406, 1
        %v408 = vadd.f32 %v406, %v407
        %s409 = vtos %v408
        %v410 = vstv %s409
        %v411 = vsel %vm394, %v393, 0.0
        %412 = vadd.xlane.f32.xlu0 %v411
        %v413 = vpop.xlane.xlu0 %412
        %v414 = vsel %vm399, %v413, 0.0
        %415 = vadd.xlane.f32.xlu0 %v414
        %v416 = vpop.xlane.xlu0 %415
        %v417 = vrot.slane %v416, 4
        %v418 = vadd.f32 %v416, %v417
        %v419 = vrot.slane %v418, 2
        %v420 = vadd.f32 %v418, %v419
        %v421 = vrot.slane %v420, 1
        %v422 = vadd.f32 %v420, %v421
        %s423 = vtos %v422
        %v424 = vstv %s423
        %v425 = vld [vmem:[%s311] sm:$0x3]
        %v427 = vrot.slane %v425, 7
        %v429 = vsub.f32 %v425, %v427
        %v430 = vand.u32 2147483647, %v429
        %v431 = vsub.f32 0.0, %v430
        %v432 = vmul.f32 %v431, 1.442695
        %v433 = vpow.pop %v432
        %v434 = vadd.f32 %v433, 1.0
        %v435 = vrcp.pop %v434
        %vm436 = vcmp.ge.f32.partialorder %v429, 0.0
        %v437 = vsub.f32 1.0, %v435
        %v438 = vsel %vm436, %v435, %v437
        %v439 = vlog2.pop %v434
        %v440 = vmul.f32 %v439, 0.6931472
        %v441 = vmul.f32 %v437, %v430
        %v442 = vadd.f32 %v440, %v441
        %v443 = vsub.f32 0.0, %v442
        %v445 = vrot.slane %v443, 1
        %vm447 = vcmask 57344
        %v448 = vsel %vm447, %v445, 0.0
        %449 = vadd.xlane.f32.xlu0 %v448
        %v450 = vpop.xlane.xlu0 %449
        %v451 = vrot.slane %v450, 4
        %v452 = vadd.f32 %v450, %v451
        %v453 = vrot.slane %v452, 2
        %v454 = vadd.f32 %v452, %v453
        %v455 = vrot.slane %v454, 1
        %v456 = vadd.f32 %v454, %v455
        %s457 = vtos %v456
        %v458 = vstv %s457
        %vm459 = vcmask 58369
        %460 = vst.msk [vmem:[%s350 - $0x1] sm:$0x2] %vm459, %v438
        %v461 = vsel %vm399, %v410, %v424
        %vm462 = vcmask 15360
        %v463 = vsel %vm462, %v461, %v458
        %vm464 = vcmask 16384
        %465 = vst.msk [vmem:[%s356] sm:$0x1] %vm464, %v463
        %s466 = sand.u32 %s133, 1
        %s467 = scalar_lea.sflag [#allocation4], %s466
        %s468 = sand.u32 %s133, 1
        %s469 = smul.addr %s468, 8
        %s470 = scalar_lea.vmem [#allocation8], %s469
        %s471 = sand.u32 %s29, 1
        %s472 = scalar_lea.sflag [#allocation10], %s471
        %s473 = sand.u32 %s161, 1
        %s474 = scalar_lea.vmem [#allocation9], %s473
        %s475 = sand.u32 %s29, 1
        %s476 = scalar_lea.sflag [#allocation10], %s475
        %s477 = sand.u32 %s189, 1
        %s478 = scalar_lea.vmem [#allocation11], %s477
        // Predicated region
        $region45: #{tpu_custom_call.1} parent=31 // pred_check
          %p479 = pneg %p143
        $region46: #{tpu_custom_call.1} parent=31 // pred_check_branch
          %481 = sbr.rel (%p479) target = $region48
        $region47: #{tpu_custom_call.1} parent=31 // pred_region
          %483 = vsyncadd %s467, 0
          %s484 = sadd.s32 %s34, %s33
          %s485 = smul.addr %s484, 8
          %s486 = scalar_lea.hbm %s3, %s485
          %s488 = sshll.u32 %s470, 4
          %s489 = int_to_ptr.vmem [resolvable:$true] %s488
          %s490 = sshll.u32 %s486, 4
          %s491 = int_to_ptr.hbm [resolvable:$true] %s490
          %493 = dma.vmem_to_hbm [thread:$0]  %s489, 128, %s491, %s467
        $region48: #{tpu_custom_call.1} parent=31 // pred_fallthru
          _
        // Predicated region
        $region49: #{tpu_custom_call.1} parent=31 // pred_check
          %p494 = pneg %p171
        $region50: #{tpu_custom_call.1} parent=31 // pred_check_branch
          %496 = sbr.rel (%p494) target = $region52
        $region51: #{tpu_custom_call.1} parent=31 // pred_region
          %498 = vsyncadd %s472, 0
          %s499 = sadd.s32 %s34, %s33
          %s500 = scalar_lea.hbm %s4, %s499
          %s502 = sshll.u32 %s474, 4
          %s503 = int_to_ptr.vmem [resolvable:$true] %s502
          %s504 = sshll.u32 %s500, 4
          %s505 = int_to_ptr.hbm [resolvable:$true] %s504
          %507 = dma.vmem_to_hbm [thread:$0]  %s503, 16, %s505, %s472
        $region52: #{tpu_custom_call.1} parent=31 // pred_fallthru
          _
        // Predicated region
        $region53: #{tpu_custom_call.1} parent=31 // pred_check
          %p508 = pneg %p199
        $region54: #{tpu_custom_call.1} parent=31 // pred_check_branch
          %510 = sbr.rel (%p508) target = $region56
        $region55: #{tpu_custom_call.1} parent=31 // pred_region
          %512 = vsyncadd %s476, 0
          %s513 = sadd.s32 %s34, %s33
          %s514 = scalar_lea.hbm %s5, %s513
          %s516 = sshll.u32 %s478, 4
          %s517 = int_to_ptr.vmem [resolvable:$true] %s516
          %s518 = sshll.u32 %s514, 4
          %s519 = int_to_ptr.hbm [resolvable:$true] %s518
          %521 = dma.vmem_to_hbm [thread:$0]  %s517, 16, %s519, %s476
        $region56: #{tpu_custom_call.1} parent=31 // pred_fallthru
          _
      $region32: #{tpu_custom_call.1} parent=5 // pred_fallthru
        _
      %p522 = scmp.le.s32.totalorder 2, %s24
      // Predicated region
      $region57: #{tpu_custom_call.1} parent=5 // pred_check
        %p523 = pneg %p522
      $region58: #{tpu_custom_call.1} parent=5 // pred_check_branch
        %525 = sbr.rel (%p523) target = $region60
      $region59: #{tpu_custom_call.1} parent=5 // pred_region
        %s526 = ssub.s32 %s24, 2
        // Predicated region
        $region61: #{tpu_custom_call.1} parent=59 // pred_check
          %p527 = pneg %p149
        $region62: #{tpu_custom_call.1} parent=59 // pred_check_branch
          %529 = sbr.rel (%p527) target = $region64
        $region63: #{tpu_custom_call.1} parent=59 // pred_region
          %s530 = sand.u32 %s134, 1
          %s531 = scalar_lea.sflag [#allocation4], %s530
          %s532 = sand.u32 %s134, 1
          %s533 = smul.addr %s532, 8
          %s534 = scalar_lea.vmem [#allocation8], %s533
          %536 = dma.done %s531, 128
        $region64: #{tpu_custom_call.1} parent=59 // pred_fallthru
          _
        // Predicated region
        $region65: #{tpu_custom_call.1} parent=59 // pred_check
          %p537 = pneg %p177
        $region66: #{tpu_custom_call.1} parent=59 // pred_check_branch
          %539 = sbr.rel (%p537) target = $region68
        $region67: #{tpu_custom_call.1} parent=59 // pred_region
          %s540 = sand.u32 %s30, 1
          %s541 = scalar_lea.sflag [#allocation10], %s540
          %s542 = sand.u32 %s162, 1
          %s543 = scalar_lea.vmem [#allocation9], %s542
          %545 = dma.done %s541, 16
        $region68: #{tpu_custom_call.1} parent=59 // pred_fallthru
          _
        // Predicated region
        $region69: #{tpu_custom_call.1} parent=59 // pred_check
          %p546 = pneg %p205
        $region70: #{tpu_custom_call.1} parent=59 // pred_check_branch
          %548 = sbr.rel (%p546) target = $region72
        $region71: #{tpu_custom_call.1} parent=59 // pred_region
          %s549 = sand.u32 %s30, 1
          %s550 = scalar_lea.sflag [#allocation10], %s549
          %s551 = sand.u32 %s190, 1
          %s552 = scalar_lea.vmem [#allocation11], %s551
          %554 = dma.done %s550, 16
        $region72: #{tpu_custom_call.1} parent=59 // pred_fallthru
          _
      $region60: #{tpu_custom_call.1} parent=5 // pred_fallthru
        _
    $region6: #{tpu_custom_call.1} parent=1 // loop_footer
      %s28 = sadd.s32 1, %s24
    $region7: #{tpu_custom_call.1} parent=1 // loop_footer_branch
      %23 = sbr.rel target = $region3
    $region8: #{tpu_custom_call.1} parent=1 // loop_exit
      _
    %555 = vsyncpa [#allocation3], 1
    %s556 = scalar_lea.sflag [#allocation3], 1
    %557 = vsyncpa %s556, 1
    %558 = vsyncpa [#allocation6], 1
    %s559 = scalar_lea.sflag [#allocation6], 1
    %560 = vsyncpa %s559, 1
    %561 = vsyncpa [#allocation4], 1
    %s562 = scalar_lea.sflag [#allocation4], 1
    %563 = vsyncpa %s562, 1
    %564 = vsyncpa [#allocation10], 1
    %s565 = scalar_lea.sflag [#allocation10], 1
    %566 = vsyncpa %s565, 1

</llo_original>
